<compile_context>
chip_gen: v7x
topology: tpu7x:2x2x1
jax: 0.10.0
libtpu: 0.0.40
codegen_flags: <defaults>
</compile_context>

<pallas_src>
import functools

import jax
import jax.numpy as jnp
from jax.experimental import pallas as pl
from jax.experimental.pallas import tpu as pltpu


def _round_up(n: int, m: int) -> int:
    return ((n + m - 1) // m) * m


@functools.lru_cache(maxsize=1)
def _vmem_capacity_bytes() -> int:
    try:
        info = pltpu.get_tpu_info()
        cap = int(getattr(info, "vmem_capacity_bytes", 0))
        if cap > 0:
            return cap
    except Exception:
        pass
    return 64 * 1024 * 1024  # conservative default: v7x per-TensorCore VMEM


# ---------------------------------------------------------------------------
# Kernels
# ---------------------------------------------------------------------------
def ff_resident_kernel(x_ref, w1_ref, b1_ref, w2_ref, b2_ref, o_ref):
    # Weights fully resident in VMEM (constant block index -> DMA'd once).
    # x_ref: (TM, dm)  w1_ref: (dm, dh)  b1_ref: (1, dh)
    # w2_ref: (dh, dm) b2_ref: (1, dm)   o_ref: (TM, dm)
    h = jnp.dot(x_ref[...], w1_ref[...], preferred_element_type=jnp.float32)
    h = jnp.maximum(h + b1_ref[...].astype(jnp.float32), 0.0)  # bias + ReLU in f32
    # TODO(synk): dropout is identity in eval mode; training-mode dropout
    # (pltpu.prng_random_bits mask) is intentionally omitted.
    out = jnp.dot(h.astype(w2_ref.dtype), w2_ref[...],
                  preferred_element_type=jnp.float32)
    o_ref[...] = (out + b2_ref[...].astype(jnp.float32)).astype(o_ref.dtype)


def ff_streamed_kernel(x_ref, w1_ref, b1_ref, w2_ref, b2_ref, o_ref, acc_ref):
    # Hidden dim streamed in (dm, tk_h)/(tk_h, dm) chunks; f32 accumulation.
    k = pl.program_id(1)

    @pl.when(k == 0)
    def _init():
        acc_ref[...] = jnp.zeros_like(acc_ref)

    h = jnp.dot(x_ref[...], w1_ref[...], preferred_element_type=jnp.float32)
    h = jnp.maximum(h + b1_ref[...].astype(jnp.float32), 0.0)
    acc_ref[...] += jnp.dot(h.astype(w2_ref.dtype), w2_ref[...],
                            preferred_element_type=jnp.float32)

    @pl.when(k == pl.num_programs(1) - 1)
    def _finalize():
        o_ref[...] = (acc_ref[...] + b2_ref[...].astype(jnp.float32)).astype(o_ref.dtype)


# ---------------------------------------------------------------------------
# Tile selection (all static / trace-time Python)
# ---------------------------------------------------------------------------
def _select_tiles(N, dm_pad, dh_pad, x_it, w_it, o_it, budget, force_path):
    row_cap = _round_up(max(N, 1), 16)
    if N > 16:
        # Keep >= 2 row tiles so both TensorCores (v7x megacore) get work.
        row_cap = min(row_cap, _round_up(-(-N // 2), 16))

    tm_cands = sorted({min(c, row_cap) for c in (768, 512, 384, 256, 128, 64, 32, 16)},
                      reverse=True)
    # Prefer 256-aligned hidden chunks (MXU tile width on v6e/v7x).
    tk_cands = [c for c in (1024, 768, 512, 256, 128) if c <= dh_pad and dh_pad % c == 0]
    if force_path == "streamed":
        tk_cands = [128]  # force multiple k-steps for testing the streamed path
    if not tk_cands:
        tk_cands = [dh_pad]

    bias_bytes = 2 * (dh_pad + dm_pad) * w_it

    def fits_resident(tm):
        weights = 2 * 2 * dm_pad * dh_pad * w_it   # w1 + w2, double-buffered
        io = 2 * tm * dm_pad * (x_it + o_it)       # x + out, double-buffered
        interm = tm * dh_pad * 4                   # f32 hidden activations
        return weights + bias_bytes + io + interm <= budget

    def fits_streamed(tm, tk):
        weights = 2 * 2 * dm_pad * tk * w_it       # w1/w2 chunks, double-buffered
        io = 2 * tm * dm_pad * (x_it + o_it)
        acc = tm * dm_pad * 4                      # f32 accumulator scratch
        interm = tm * tk * 4
        return weights + bias_bytes + io + acc + interm <= budget

    resident_tm = None
    if force_path != "streamed":
        for tm in tm_cands:
            if fits_resident(tm):
                resident_tm = tm
                break
    # Take the resident path only when the row tile stays MXU-friendly (or
    # already covers every row); otherwise stream with a larger row tile.
    if resident_tm is not None and (
        resident_tm >= 256 or resident_tm >= row_cap or force_path == "resident"
    ):
        return resident_tm, dh_pad, True

    for tm in tm_cands:
        for tk in tk_cands:
            if fits_streamed(tm, tk):
                return tm, tk, False
    if resident_tm is not None:
        return resident_tm, dh_pad, True
    return tm_cands[-1], tk_cands[-1], False  # last-resort fallback


# ---------------------------------------------------------------------------
# Public wrapper
# ---------------------------------------------------------------------------
@functools.partial(jax.jit, static_argnames=("_force_path",))
def position_wise_ff(x, w1, b1, w2, b2, _force_path=None):
    """Fused position-wise FF: relu(x @ w1 + b1) @ w2 + b2 (dropout = eval no-op).

    x: [B, S, d_model]; w1: [d_model, d_hidden]; b1: [d_hidden];
    w2: [d_hidden, d_model]; b2: [d_model].  (nn.Linear weights transposed,
    i.e. stored [in, out].)
    """
    B, S, d_model = x.shape
    d_hidden = w1.shape[1]
    N = B * S

    dm_pad = _round_up(d_model, 128)
    dh_pad = _round_up(d_hidden, 128)

    x_it = x.dtype.itemsize
    w_it = w1.dtype.itemsize
    o_it = x_it

    vmem_cap = _vmem_capacity_bytes()
    vmem_limit = max(32 * 1024 * 1024,
                     min(int(vmem_cap * 3 // 4), vmem_cap - 8 * 1024 * 1024))
    budget = int(vmem_limit * 0.85)  # headroom for compiler temporaries

    tm, tk_h, resident = _select_tiles(N, dm_pad, dh_pad, x_it, w_it, o_it,
                                       budget, _force_path)
    n_pad = _round_up(N, tm)
    n_row_tiles = n_pad // tm

    # ---- pad only when needed (aligned shapes skip the extra HBM pass) -----
    x2 = x.reshape(N, d_model)
    if (n_pad, dm_pad) != (N, d_model):
        x2 = jnp.zeros((n_pad, dm_pad), x.dtype).at[:N, :d_model].set(x2)
    w1p = w1 if (dm_pad, dh_pad) == (d_model, d_hidden) else \
        jnp.zeros((dm_pad, dh_pad), w1.dtype).at[:d_model, :d_hidden].set(w1)
    w2p = w2 if (dh_pad, dm_pad) == (d_hidden, d_model) else \
        jnp.zeros((dh_pad, dm_pad), w2.dtype).at[:d_hidden, :d_model].set(w2)
    b1p = b1.reshape(1, d_hidden) if dh_pad == d_hidden else \
        jnp.zeros((1, dh_pad), b1.dtype).at[0, :d_hidden].set(b1)
    b2p = b2.reshape(1, d_model) if dm_pad == d_model else \
        jnp.zeros((1, dm_pad), b2.dtype).at[0, :d_model].set(b2)
    # TODO(synk): for repeated calls with static weights, pad/cache the weights
    # once outside this function to avoid re-padding every forward pass.

    flops = 4 * N * d_model * d_hidden
    w_bytes = (w1.size + w2.size + b1.size + b2.size) * w_it
    bytes_accessed = int(
        N * d_model * (x_it + o_it) + w_bytes * (1 if resident else n_row_tiles)
    )
    cost = pl.CostEstimate(flops=flops, transcendentals=0,
                           bytes_accessed=bytes_accessed)

    if resident:
        out2 = pl.pallas_call(
            ff_resident_kernel,
            out_shape=jax.ShapeDtypeStruct((n_pad, dm_pad), x.dtype),
            grid_spec=pltpu.PrefetchScalarGridSpec(
                num_scalar_prefetch=0,
                grid=(n_row_tiles,),
                in_specs=[
                    pl.BlockSpec((tm, dm_pad), lambda i: (i, 0)),       # x rows
                    pl.BlockSpec((dm_pad, dh_pad), lambda i: (0, 0)),   # w1 (resident)
                    pl.BlockSpec((1, dh_pad), lambda i: (0, 0)),        # b1
                    pl.BlockSpec((dh_pad, dm_pad), lambda i: (0, 0)),   # w2 (resident)
                    pl.BlockSpec((1, dm_pad), lambda i: (0, 0)),        # b2
                ],
                out_specs=pl.BlockSpec((tm, dm_pad), lambda i: (i, 0)),
            ),
            compiler_params=pltpu.CompilerParams(
                dimension_semantics=("parallel",),
                vmem_limit_bytes=vmem_limit,
            ),
            cost_estimate=cost,
        )(x2, w1p, b1p, w2p, b2p)
    else:
        out2 = pl.pallas_call(
            ff_streamed_kernel,
            out_shape=jax.ShapeDtypeStruct((n_pad, dm_pad), x.dtype),
            grid_spec=pltpu.PrefetchScalarGridSpec(
                num_scalar_prefetch=0,
                grid=(n_row_tiles, dh_pad // tk_h),
                in_specs=[
                    pl.BlockSpec((tm, dm_pad), lambda i, k: (i, 0)),    # x rows
                    pl.BlockSpec((dm_pad, tk_h), lambda i, k: (0, k)),  # w1 chunk
                    pl.BlockSpec((1, tk_h), lambda i, k: (0, k)),       # b1 chunk
                    pl.BlockSpec((tk_h, dm_pad), lambda i, k: (k, 0)),  # w2 chunk
                    pl.BlockSpec((1, dm_pad), lambda i, k: (0, 0)),     # b2
                ],
                out_specs=pl.BlockSpec((tm, dm_pad), lambda i, k: (i, 0)),
                scratch_shapes=[pltpu.VMEM((tm, dm_pad), jnp.float32)],
            ),
            compiler_params=pltpu.CompilerParams(
                dimension_semantics=("parallel", "arbitrary"),
                vmem_limit_bytes=vmem_limit,
            ),
            cost_estimate=cost,
        )(x2, w1p, b1p, w2p, b2p)

    return out2[:N, :d_model].reshape(B, S, d_model)


if __name__ == "__main__":
    key = jax.random.PRNGKey(0)

    # --- test 1: small shapes consistent with the module ---------------------
    B, S, d_model, d_hidden = 2, 8, 32, 64
    kx, k1, k2, k3, k4 = jax.random.split(key, 5)
    x = jax.random.normal(kx, (B, S, d_model), dtype=jnp.float32)
    bound1 = 1.0 / jnp.sqrt(d_model)
    bound2 = 1.0 / jnp.sqrt(d_hidden)
    W1 = jax.random.uniform(k1, (d_hidden, d_model), jnp.float32, -bound1, bound1)
    b1 = jax.random.uniform(k2, (d_hidden,), jnp.float32, -bound1, bound1)
    W2 = jax.random.uniform(k3, (d_model, d_hidden), jnp.float32, -bound2, bound2)
    b2 = jax.random.uniform(k4, (d_model,), jnp.float32, -bound2, bound2)

    ref = jnp.maximum(x @ W1.T + b1, 0.0) @ W2.T + b2

    out = jax.block_until_ready(position_wise_ff(x, W1.T, b1, W2.T, b2))
    assert out.shape == (B, S, d_model)
    assert jnp.allclose(out, ref, atol=1e-5, rtol=1e-5), "resident path mismatch"

    out_s = jax.block_until_ready(
        position_wise_ff(x, W1.T, b1, W2.T, b2, _force_path="streamed"))
    assert jnp.allclose(out_s, ref, atol=1e-5, rtol=1e-5), "streamed path mismatch"

    # --- test 2: moderate shapes (2 row tiles; streamed path has 4 k-steps) --
    B2_, S2_, dm2, dh2 = 2, 96, 256, 512
    km = jax.random.split(jax.random.PRNGKey(0), 5)
    xm = jax.random.normal(km[0], (B2_, S2_, dm2), dtype=jnp.float32)
    bm1 = 1.0 / jnp.sqrt(dm2)
    bm2 = 1.0 / jnp.sqrt(dh2)
    W1m = jax.random.uniform(km[1], (dh2, dm2), jnp.float32, -bm1, bm1)
    b1m = jax.random.uniform(km[2], (dh2,), jnp.float32, -bm1, bm1)
    W2m = jax.random.uniform(km[3], (dm2, dh2), jnp.float32, -bm2, bm2)
    b2m = jax.random.uniform(km[4], (dm2,), jnp.float32, -bm2, bm2)

    hp = jax.lax.Precision.HIGHEST
    ref_m = jnp.maximum(jnp.matmul(xm, W1m.T, precision=hp) + b1m, 0.0)
    ref_m = jnp.matmul(ref_m, W2m.T, precision=hp) + b2m

    out_m = jax.block_until_ready(position_wise_ff(xm, W1m.T, b1m, W2m.T, b2m))
    assert out_m.shape == (B2_, S2_, dm2)
    assert jnp.allclose(out_m, ref_m, atol=5e-4, rtol=5e-4), "resident (med) mismatch"

    out_ms = jax.block_until_ready(
        position_wise_ff(xm, W1m.T, b1m, W2m.T, b2m, _force_path="streamed"))
    assert jnp.allclose(out_ms, ref_m, atol=5e-4, rtol=5e-4), "streamed (med) mismatch"

    print("KERNEL_OK")
</pallas_src>

<mosaic_0001>
module attributes {stable_mosaic.version = 11 : i64} {
  func.func @ff_resident_kernel(%arg0: i32, %arg1: memref<16x128xf32, #tpu.memory_space<vmem>>, %arg2: memref<128x128xf32, #tpu.memory_space<vmem>>, %arg3: memref<1x128xf32, #tpu.memory_space<vmem>>, %arg4: memref<128x128xf32, #tpu.memory_space<vmem>>, %arg5: memref<1x128xf32, #tpu.memory_space<vmem>>, %arg6: memref<16x128xf32, #tpu.memory_space<vmem>>) attributes {dimension_semantics = [#tpu.dimension_semantics<parallel>], iteration_bounds = array<i64: 1>, scalar_prefetch = 0 : i64, scratch_operands = 0 : i64, tpu.core_type = #tpu.core_type<tc>, window_params = [{transform_indices = @transform_0, window_bounds = array<i64: 16, 128>}, {pipeline_mode = #tpu.pipeline_mode<synchronous>, transform_indices = @transform_1, window_bounds = array<i64: 128, 128>}, {pipeline_mode = #tpu.pipeline_mode<synchronous>, transform_indices = @transform_2, window_bounds = array<i64: 1, 128>}, {pipeline_mode = #tpu.pipeline_mode<synchronous>, transform_indices = @transform_3, window_bounds = array<i64: 128, 128>}, {pipeline_mode = #tpu.pipeline_mode<synchronous>, transform_indices = @transform_4, window_bounds = array<i64: 1, 128>}, {transform_indices = @transform_5, window_bounds = array<i64: 16, 128>}]} {
    %c0 = arith.constant 0 : index
    %c0_0 = arith.constant 0 : index
    %0 = vector.load %arg1[%c0, %c0_0] : memref<16x128xf32, #tpu.memory_space<vmem>>, vector<16x128xf32>
    %c0_1 = arith.constant 0 : index
    %c0_2 = arith.constant 0 : index
    %1 = vector.load %arg2[%c0_1, %c0_2] : memref<128x128xf32, #tpu.memory_space<vmem>>, vector<128x128xf32>
    %cst = arith.constant dense<0.000000e+00> : vector<16x128xf32>
    %2 = tpu.matmul %0, %1, %cst {dimension_numbers = #tpu.dot_dimension_numbers<[1], [0], [0], [1], [0, 0, 1, 1], [], []>} : vector<16x128xf32>, vector<128x128xf32>, vector<16x128xf32> -> vector<16x128xf32>
    %c0_3 = arith.constant 0 : index
    %c0_4 = arith.constant 0 : index
    %3 = vector.load %arg3[%c0_3, %c0_4] : memref<1x128xf32, #tpu.memory_space<vmem>>, vector<1x128xf32>
    %4 = vector.broadcast %3 : vector<1x128xf32> to vector<16x128xf32>
    %5 = arith.addf %2, %4 : vector<16x128xf32>
    %cst_5 = arith.constant 0.000000e+00 : f32
    %6 = vector.broadcast %cst_5 : f32 to vector<16x128xf32>
    %7 = arith.maximumf %5, %6 : vector<16x128xf32>
    %c0_6 = arith.constant 0 : index
    %c0_7 = arith.constant 0 : index
    %8 = vector.load %arg4[%c0_6, %c0_7] : memref<128x128xf32, #tpu.memory_space<vmem>>, vector<128x128xf32>
    %cst_8 = arith.constant dense<0.000000e+00> : vector<16x128xf32>
    %9 = tpu.matmul %7, %8, %cst_8 {dimension_numbers = #tpu.dot_dimension_numbers<[1], [0], [0], [1], [0, 0, 1, 1], [], []>} : vector<16x128xf32>, vector<128x128xf32>, vector<16x128xf32> -> vector<16x128xf32>
    %c0_9 = arith.constant 0 : index
    %c0_10 = arith.constant 0 : index
    %10 = vector.load %arg5[%c0_9, %c0_10] : memref<1x128xf32, #tpu.memory_space<vmem>>, vector<1x128xf32>
    %11 = vector.broadcast %10 : vector<1x128xf32> to vector<16x128xf32>
    %12 = arith.addf %9, %11 : vector<16x128xf32>
    %c0_11 = arith.constant 0 : index
    %c0_12 = arith.constant 0 : index
    %13 = vector.load %arg6[%c0_11, %c0_12] : memref<16x128xf32, #tpu.memory_space<vmem>>, vector<16x128xf32>
    tpu.vector_store %arg6[%c0_11, %c0_12], %12 {strides = array<i32>} : memref<16x128xf32, #tpu.memory_space<vmem>>, vector<16x128xf32>,
    return
  }
  func.func @transform_0(%arg0: i32) -> (i32, i32) {
    %c0_i32 = arith.constant 0 : i32
    %c0_i32_0 = arith.constant 0 : i32
    return %arg0, %c0_i32 : i32, i32
  }
  func.func @transform_1(%arg0: i32) -> (i32, i32) {
    %c0_i32 = arith.constant 0 : i32
    %c0_i32_0 = arith.constant 0 : i32
    %c0_i32_1 = arith.constant 0 : i32
    return %c0_i32, %c0_i32_0 : i32, i32
  }
  func.func @transform_2(%arg0: i32) -> (i32, i32) {
    %c0_i32 = arith.constant 0 : i32
    %c0_i32_0 = arith.constant 0 : i32
    %c0_i32_1 = arith.constant 0 : i32
    return %c0_i32, %c0_i32_0 : i32, i32
  }
  func.func @transform_3(%arg0: i32) -> (i32, i32) {
    %c0_i32 = arith.constant 0 : i32
    %c0_i32_0 = arith.constant 0 : i32
    %c0_i32_1 = arith.constant 0 : i32
    return %c0_i32, %c0_i32_0 : i32, i32
  }
  func.func @transform_4(%arg0: i32) -> (i32, i32) {
    %c0_i32 = arith.constant 0 : i32
    %c0_i32_0 = arith.constant 0 : i32
    %c0_i32_1 = arith.constant 0 : i32
    return %c0_i32, %c0_i32_0 : i32, i32
  }
  func.func @transform_5(%arg0: i32) -> (i32, i32) {
    %c0_i32 = arith.constant 0 : i32
    %c0_i32_0 = arith.constant 0 : i32
    return %arg0, %c0_i32 : i32, i32
  }
}

</mosaic_0001>

<llo_original>
// kernel: position_wise_ff.1
$region0: #{position_wise_ff.1}
  #allocation0 [shape = 'u32[]', space=smem, size = 0x4, offset = 0x4, fixed_abs, tag = 'smem constant byte address 0x4 - core index']
  #allocation1 [shape = 'u32[144,128]{1,0:T(1,128)}', space=vmem, size = 0x12000, scoped, tag = 'internal scratch']
  %s0 = inlined_call_operand.vmem [shape: f32[16,128], index: 0, kind: input, shape index: {}]
  %s1 = inlined_call_operand.vmem [shape: f32[128,128], index: 1, kind: input, shape index: {}]
  %s2 = inlined_call_operand.vmem [shape: f32[1,128], index: 2, kind: input, shape index: {}]
  %s3 = inlined_call_operand.vmem [shape: f32[128,128], index: 3, kind: input, shape index: {}]
  %s4 = inlined_call_operand.vmem [shape: f32[1,128], index: 4, kind: input, shape index: {}]
  %s5 = inlined_call_operand.vmem [shape: f32[16,128], index: 5, kind: output, shape index: {}]
  %s6 = sld [smem:[#allocation0]]
  $region30: #{position_wise_ff.1} parent=0
    _
  %s8 = ssub.s32 1, %s6
  %s9 = scalar_select 0, %s8, %s6
  // Predicated region
  $region2: #{position_wise_ff.1} parent=0 // pred_check
    _
  $region3: #{position_wise_ff.1} parent=0 // pred_check_branch
    %11 = sbr.rel (0) target = $region5
  $region4: #{position_wise_ff.1} parent=0 // pred_region
    _
  $region5: #{position_wise_ff.1} parent=0 // pred_fallthru
    _
  // Predicated region
  $region6: #{position_wise_ff.1} parent=0 // pred_check
    _
  $region7: #{position_wise_ff.1} parent=0 // pred_check_branch
    %13 = sbr.rel (0) target = $region9
  $region8: #{position_wise_ff.1} parent=0 // pred_region
    _
  $region9: #{position_wise_ff.1} parent=0 // pred_fallthru
    _
  // Predicated region
  $region10: #{position_wise_ff.1} parent=0 // pred_check
    _
  $region11: #{position_wise_ff.1} parent=0 // pred_check_branch
    %15 = sbr.rel (0) target = $region13
  $region12: #{position_wise_ff.1} parent=0 // pred_region
    _
  $region13: #{position_wise_ff.1} parent=0 // pred_fallthru
    _
  // Predicated region
  $region14: #{position_wise_ff.1} parent=0 // pred_check
    _
  $region15: #{position_wise_ff.1} parent=0 // pred_check_branch
    %17 = sbr.rel (0) target = $region17
  $region16: #{position_wise_ff.1} parent=0 // pred_region
    _
  $region17: #{position_wise_ff.1} parent=0 // pred_fallthru
    _
  // Predicated region
  $region18: #{position_wise_ff.1} parent=0 // pred_check
    _
  $region19: #{position_wise_ff.1} parent=0 // pred_check_branch
    %19 = sbr.rel (0) target = $region21
  $region20: #{position_wise_ff.1} parent=0 // pred_region
    _
  $region21: #{position_wise_ff.1} parent=0 // pred_fallthru
    _
  %v20 = vld [vmem:[%s0] sm:$0xff]
  %v21 = vld [vmem:[%s0 + $0x8] sm:$0xff]
  %v22 = vld [vmem:[%s1] sm:$0xff]
  %v23 = vld [vmem:[%s1 + $0x8] sm:$0xff]
  %v24 = vld [vmem:[%s1 + $0x10] sm:$0xff]
  %v25 = vld [vmem:[%s1 + $0x18] sm:$0xff]
  %v26 = vld [vmem:[%s1 + $0x20] sm:$0xff]
  %v27 = vld [vmem:[%s1 + $0x28] sm:$0xff]
  %v28 = vld [vmem:[%s1 + $0x30] sm:$0xff]
  %v29 = vld [vmem:[%s1 + $0x38] sm:$0xff]
  %v30 = vld [vmem:[%s1 + $0x40] sm:$0xff]
  %v31 = vld [vmem:[%s1 + $0x48] sm:$0xff]
  %v32 = vld [vmem:[%s1 + $0x50] sm:$0xff]
  %v33 = vld [vmem:[%s1 + $0x58] sm:$0xff]
  %v34 = vld [vmem:[%s1 + $0x60] sm:$0xff]
  %v35 = vld [vmem:[%s1 + $0x68] sm:$0xff]
  %v36 = vld [vmem:[%s1 + $0x70] sm:$0xff]
  %v37 = vld [vmem:[%s1 + $0x78] sm:$0xff]
  %v38 = vld [vmem:[%s2] sm:$0x1]
  %v40 = vlaneseq
  %v41 = vshrl.u32 %v40, 7
  %v42 = vsub.s32 0, %v41
  %v43 = vrot.slane %v38, %v42
  %45 = vmatprep.subr.mxu0 0.0
  %46 = vmatpush1.msra.mxu0 %v22
  %47 = vmatprep.subr.mxu0 0.0
  %48 = vmatpush1.msra.mxu0 %v23
  %49 = vmatprep.subr.mxu0 0.0
  %50 = vmatpush1.msra.mxu0 %v24
  %51 = vmatprep.subr.mxu0 0.0
  %52 = vmatpush1.msra.mxu0 %v25
  %53 = vmatprep.subr.mxu0 0.0
  %54 = vmatpush1.msra.mxu0 %v26
  %55 = vmatprep.subr.mxu0 0.0
  %56 = vmatpush1.msra.mxu0 %v27
  %57 = vmatprep.subr.mxu0 0.0
  %58 = vmatpush1.msra.mxu0 %v28
  %59 = vmatprep.subr.mxu0 0.0
  %60 = vmatpush1.msra.mxu0 %v29
  %61 = vmatprep.subr.mxu0 0.0
  %62 = vmatpush1.msra.mxu0 %v30
  %63 = vmatprep.subr.mxu0 0.0
  %64 = vmatpush1.msra.mxu0 %v31
  %65 = vmatprep.subr.mxu0 0.0
  %66 = vmatpush1.msra.mxu0 %v32
  %67 = vmatprep.subr.mxu0 0.0
  %68 = vmatpush1.msra.mxu0 %v33
  %69 = vmatprep.subr.mxu0 0.0
  %70 = vmatpush1.msra.mxu0 %v34
  %71 = vmatprep.subr.mxu0 0.0
  %72 = vmatpush1.msra.mxu0 %v35
  %73 = vmatprep.subr.mxu0 0.0
  %74 = vmatpush1.msra.mxu0 %v36
  %75 = vmatprep.subr.mxu0 0.0
  %76 = vmatpush1.msra.mxu0 %v37
  %77 = vmatprep.subr.mxu0 0.0
  %78 = vmatpush1.msra.mxu0 0.0
  %79 = vmatprep.subr.mxu0 0.0
  %80 = vmatpush1.msra.mxu0 0.0
  %81 = vmatprep.subr.mxu0 0.0
  %82 = vmatpush1.msra.mxu0 0.0
  %83 = vmatprep.subr.mxu0 0.0
  %84 = vmatpush1.msra.mxu0 0.0
  %85 = vmatprep.subr.mxu0 0.0
  %86 = vmatpush1.msra.mxu0 0.0
  %87 = vmatprep.subr.mxu0 0.0
  %88 = vmatpush1.msra.mxu0 0.0
  %89 = vmatprep.subr.mxu0 0.0
  %90 = vmatpush1.msra.mxu0 0.0
  %91 = vmatprep.subr.mxu0 0.0
  %92 = vmatpush1.msra.mxu0 0.0
  %93 = vmatprep.subr.mxu0 0.0
  %94 = vmatpush1.msra.mxu0 0.0
  %95 = vmatprep.subr.mxu0 0.0
  %96 = vmatpush1.msra.mxu0 0.0
  %97 = vmatprep.subr.mxu0 0.0
  %98 = vmatpush1.msra.mxu0 0.0
  %99 = vmatprep.subr.mxu0 0.0
  %100 = vmatpush1.msra.mxu0 0.0
  %101 = vmatprep.subr.mxu0 0.0
  %102 = vmatpush1.msra.mxu0 0.0
  %103 = vmatprep.subr.mxu0 0.0
  %104 = vmatpush1.msra.mxu0 0.0
  %105 = vmatprep.subr.mxu0 0.0
  %106 = vmatpush1.msra.mxu0 0.0
  %107 = vmatprep.subr.mxu0 0.0
  %108 = vmatpush1.msra.mxu0 0.0
  %109 = vmatprep.mubr.f32.mxu0 0.0
  %110 = vmatmul.mubr.f32.gmra.mrb[0].mxu0 %v20
  %v111 = vpop.f32.mrb[0].mxu0
  %v112 = vadd.f32 %v43, %v111
  %v113 = vpop.f32.mrb[0].mxu0
  %114 = vmatprep.mubr.f32.mxu0 0.0
  %115 = vmatmul.mubr.f32.gmra.mrb[0].mxu0 %v21
  %v116 = vpop.f32.mrb[0].mxu0
  %v117 = vadd.f32 %v43, %v116
  %v118 = vpop.f32.mrb[0].mxu0
  %119 = vdwg.mxu0
  %v120 = vmax.f32 %v112, 0.0
  %v121 = vmax.f32 %v117, 0.0
  %v122 = vld [vmem:[%s3] sm:$0xff]
  %v123 = vld [vmem:[%s3 + $0x8] sm:$0xff]
  %v124 = vld [vmem:[%s3 + $0x10] sm:$0xff]
  %v125 = vld [vmem:[%s3 + $0x18] sm:$0xff]
  %v126 = vld [vmem:[%s3 + $0x20] sm:$0xff]
  %v127 = vld [vmem:[%s3 + $0x28] sm:$0xff]
  %v128 = vld [vmem:[%s3 + $0x30] sm:$0xff]
  %v129 = vld [vmem:[%s3 + $0x38] sm:$0xff]
  %v130 = vld [vmem:[%s3 + $0x40] sm:$0xff]
  %v131 = vld [vmem:[%s3 + $0x48] sm:$0xff]
  %v132 = vld [vmem:[%s3 + $0x50] sm:$0xff]
  %v133 = vld [vmem:[%s3 + $0x58] sm:$0xff]
  %v134 = vld [vmem:[%s3 + $0x60] sm:$0xff]
  %v135 = vld [vmem:[%s3 + $0x68] sm:$0xff]
  %v136 = vld [vmem:[%s3 + $0x70] sm:$0xff]
  %v137 = vld [vmem:[%s3 + $0x78] sm:$0xff]
  %v138 = vld [vmem:[%s4] sm:$0x1]
  %v140 = vlaneseq
  %v141 = vshrl.u32 %v140, 7
  %v142 = vsub.s32 0, %v141
  %v143 = vrot.slane %v138, %v142
  %145 = vmatprep.subr.mxu0 0.0
  %146 = vmatpush1.msra.mxu0 %v122
  %147 = vmatprep.subr.mxu0 0.0
  %148 = vmatpush1.msra.mxu0 %v123
  %149 = vmatprep.subr.mxu0 0.0
  %150 = vmatpush1.msra.mxu0 %v124
  %151 = vmatprep.subr.mxu0 0.0
  %152 = vmatpush1.msra.mxu0 %v125
  %153 = vmatprep.subr.mxu0 0.0
  %154 = vmatpush1.msra.mxu0 %v126
  %155 = vmatprep.subr.mxu0 0.0
  %156 = vmatpush1.msra.mxu0 %v127
  %157 = vmatprep.subr.mxu0 0.0
  %158 = vmatpush1.msra.mxu0 %v128
  %159 = vmatprep.subr.mxu0 0.0
  %160 = vmatpush1.msra.mxu0 %v129
  %161 = vmatprep.subr.mxu0 0.0
  %162 = vmatpush1.msra.mxu0 %v130
  %163 = vmatprep.subr.mxu0 0.0
  %164 = vmatpush1.msra.mxu0 %v131
  %165 = vmatprep.subr.mxu0 0.0
  %166 = vmatpush1.msra.mxu0 %v132
  %167 = vmatprep.subr.mxu0 0.0
  %168 = vmatpush1.msra.mxu0 %v133
  %169 = vmatprep.subr.mxu0 0.0
  %170 = vmatpush1.msra.mxu0 %v134
  %171 = vmatprep.subr.mxu0 0.0
  %172 = vmatpush1.msra.mxu0 %v135
  %173 = vmatprep.subr.mxu0 0.0
  %174 = vmatpush1.msra.mxu0 %v136
  %175 = vmatprep.subr.mxu0 0.0
  %176 = vmatpush1.msra.mxu0 %v137
  %177 = vmatprep.subr.mxu0 0.0
  %178 = vmatpush1.msra.mxu0 0.0
  %179 = vmatprep.subr.mxu0 0.0
  %180 = vmatpush1.msra.mxu0 0.0
  %181 = vmatprep.subr.mxu0 0.0
  %182 = vmatpush1.msra.mxu0 0.0
  %183 = vmatprep.subr.mxu0 0.0
  %184 = vmatpush1.msra.mxu0 0.0
  %185 = vmatprep.subr.mxu0 0.0
  %186 = vmatpush1.msra.mxu0 0.0
  %187 = vmatprep.subr.mxu0 0.0
  %188 = vmatpush1.msra.mxu0 0.0
  %189 = vmatprep.subr.mxu0 0.0
  %190 = vmatpush1.msra.mxu0 0.0
  %191 = vmatprep.subr.mxu0 0.0
  %192 = vmatpush1.msra.mxu0 0.0
  %193 = vmatprep.subr.mxu0 0.0
  %194 = vmatpush1.msra.mxu0 0.0
  %195 = vmatprep.subr.mxu0 0.0
  %196 = vmatpush1.msra.mxu0 0.0
  %197 = vmatprep.subr.mxu0 0.0
  %198 = vmatpush1.msra.mxu0 0.0
  %199 = vmatprep.subr.mxu0 0.0
  %200 = vmatpush1.msra.mxu0 0.0
  %201 = vmatprep.subr.mxu0 0.0
  %202 = vmatpush1.msra.mxu0 0.0
  %203 = vmatprep.subr.mxu0 0.0
  %204 = vmatpush1.msra.mxu0 0.0
  %205 = vmatprep.subr.mxu0 0.0
  %206 = vmatpush1.msra.mxu0 0.0
  %207 = vmatprep.subr.mxu0 0.0
  %208 = vmatpush1.msra.mxu0 0.0
  %209 = vmatprep.mubr.f32.mxu0 0.0
  %210 = vmatmul.mubr.f32.gmra.mrb[0].mxu0 %v120
  %v211 = vpop.f32.mrb[0].mxu0
  %v212 = vadd.f32 %v143, %v211
  %v213 = vpop.f32.mrb[0].mxu0
  %214 = vmatprep.mubr.f32.mxu0 0.0
  %215 = vmatmul.mubr.f32.gmra.mrb[0].mxu0 %v121
  %v216 = vpop.f32.mrb[0].mxu0
  %v217 = vadd.f32 %v143, %v216
  %v218 = vpop.f32.mrb[0].mxu0
  %219 = vdwg.mxu0
  %220 = vst [vmem:[%s5] sm:$0xff] %v212
  %221 = vst [vmem:[%s5 + $0x8] sm:$0xff] %v217
  // Predicated region
  $region22: #{position_wise_ff.1} parent=0 // pred_check
    _
  $region23: #{position_wise_ff.1} parent=0 // pred_check_branch
    %223 = sbr.rel (0) target = $region25
  $region24: #{position_wise_ff.1} parent=0 // pred_region
    _
  $region25: #{position_wise_ff.1} parent=0 // pred_fallthru
    _
  // Predicated region
  $region26: #{position_wise_ff.1} parent=0 // pred_check
    _
  $region27: #{position_wise_ff.1} parent=0 // pred_check_branch
    %225 = sbr.rel (0) target = $region29
  $region28: #{position_wise_ff.1} parent=0 // pred_region
    _
  $region29: #{position_wise_ff.1} parent=0 // pred_fallthru
    _

</llo_original>
